<compile_context>
chip_gen: v5e
topology: v5e:2x2
jax: 0.10.0
libtpu: 0.0.40
codegen_flags: <defaults>
</compile_context>

<pallas_src>
import functools

import jax
import jax.numpy as jnp
from jax.experimental import pallas as pl
from jax.experimental.pallas import tpu as pltpu

DEFAULT_EPS = 1e-5


def _instance_norm1d_kernel(x_ref, y_ref, stats_ref, *, eps, inv_l, inv_lm1):
    # x_ref     : (TR, L)  rows = flattened (batch, channel), L on lanes
    # y_ref     : (TR, L)
    # stats_ref : (TR, 2)  [:, 0] = mean, [:, 1] = std (packed -> fewer DMAs)
    x = x_ref[...].astype(jnp.float32)

    # Per-row statistics over the lane axis (XLU cross-lane reductions).
    mean = jnp.sum(x, axis=-1, keepdims=True) * inv_l              # (TR, 1)
    centered = x - mean
    var = jnp.sum(centered * centered, axis=-1, keepdims=True) * inv_lm1
    std = jnp.sqrt(var) + eps                                      # eps on std

    # One reciprocal per row instead of L divides per row; approx=False keeps
    # it bit-comparable to the divide-based reference at 1e-5 tolerance.
    inv_std = pl.reciprocal(std, approx=False)                     # (TR, 1)

    y_ref[...] = (centered * inv_std).astype(y_ref.dtype)
    stats_ref[:, 0:1] = mean.astype(stats_ref.dtype)
    stats_ref[:, 1:2] = std.astype(stats_ref.dtype)


def _round_up(n, m):
    return ((n + m - 1) // m) * m


def _choose_row_tile(num_rows, length, itemsize):
    """Rows per block: ~4 MiB blocks (safe on v7x's 64 MiB VMEM once the
    pipeline holds ~4 copies; v5e/v6e have 128 MiB), clamped to [8, 1024]
    rows and to the rows actually present; multiple of 8 to fill sublanes."""
    block_budget = 4 * 1024 * 1024
    tr = block_budget // max(1, length * itemsize)
    tr = max(8, min(tr, 1024))
    tr = min(tr, _round_up(num_rows, 8))
    return _round_up(tr, 8)


def instance_norm1d(x, eps=DEFAULT_EPS):
    """x: (B, C, L) float -> (y, (mean, std)), matching the PyTorch forward."""
    B, C = x.shape[:2]
    xf = x.reshape(B, C, -1)            # mirrors x.view(B, C, -1)
    L = xf.shape[-1]
    R = B * C                           # flattened row axis; stats are per-row
    x2 = xf.reshape(R, L)

    itemsize = jnp.dtype(x.dtype).itemsize
    tr = _choose_row_tile(R, L, max(itemsize, 4))   # kernel computes in f32
    grid = (pl.cdiv(R, tr),)

    # torch std(-1) is unbiased (L-1); L == 1 gives NaN, matching torch.
    inv_l = 1.0 / L
    inv_lm1 = 1.0 / (L - 1) if L > 1 else float("nan")

    kernel = functools.partial(_instance_norm1d_kernel, eps=eps,
                               inv_l=inv_l, inv_lm1=inv_lm1)

    # NOTE: if production L is not a multiple of 128, the last lane group of
    # the y stores is masked; pad L in the caller (and mask the reductions)
    # only if that shows up as a bottleneck.
    y2, stats = pl.pallas_call(
        kernel,
        out_shape=(
            jax.ShapeDtypeStruct((R, L), x.dtype),
            jax.ShapeDtypeStruct((R, 2), x.dtype),
        ),
        grid=grid,
        in_specs=[pl.BlockSpec((tr, L), lambda r: (r, 0))],
        out_specs=(
            pl.BlockSpec((tr, L), lambda r: (r, 0)),
            pl.BlockSpec((tr, 2), lambda r: (r, 0)),
        ),
        compiler_params=pltpu.CompilerParams(
            dimension_semantics=("parallel",),
            vmem_limit_bytes=32 * 1024 * 1024,
        ),
        cost_estimate=pl.CostEstimate(
            flops=5 * R * L,
            transcendentals=2 * R,
            bytes_accessed=2 * R * L * itemsize + 2 * R * itemsize,
        ),
    )(x2)

    mean = stats[:, 0:1].reshape(B, C, 1)
    std = stats[:, 1:2].reshape(B, C, 1)
    return y2.reshape(x.shape), (mean, std)


def instance_norm1d_ref(x, eps=DEFAULT_EPS):
    """Pure-JAX reference with identical semantics (for validation)."""
    B, C = x.shape[:2]
    xf = x.reshape(B, C, -1)
    L = xf.shape[-1]
    mean = xf.mean(-1, keepdims=True)
    var = jnp.sum((xf - mean) ** 2, axis=-1, keepdims=True) / (L - 1)
    std = jnp.sqrt(var) + eps
    y = (xf - mean) / std
    return y.reshape(x.shape), (mean, std)


if __name__ == "__main__":
    # Small but lane-dense test size: L = 128 keeps y stores unmasked.
    B, C, L = 2, 4, 128

    key = jax.random.PRNGKey(0)
    x = jax.random.normal(key, (B, C, L), jnp.float32) * 2.0 + 0.5

    y, (mean, std) = jax.block_until_ready(instance_norm1d(x))
    y_ref, (mean_ref, std_ref) = jax.block_until_ready(instance_norm1d_ref(x))

    assert y.shape == (B, C, L)
    assert mean.shape == (B, C, 1) and std.shape == (B, C, 1)
    assert jnp.allclose(y, y_ref, atol=1e-5, rtol=1e-5), (
        float(jnp.max(jnp.abs(y - y_ref))))
    assert jnp.allclose(mean, mean_ref.astype(mean.dtype), atol=1e-5,
                        rtol=1e-5), float(jnp.max(jnp.abs(mean - mean_ref)))
    assert jnp.allclose(std, std_ref.astype(std.dtype), atol=1e-5,
                        rtol=1e-5), float(jnp.max(jnp.abs(std - std_ref)))
    print("KERNEL_OK")
</pallas_src>

<mosaic_0001>
module attributes {stable_mosaic.version = 11 : i64} {
  func.func @_instance_norm1d_kernel(%arg0: i32, %arg1: memref<8x128xf32, #tpu.memory_space<vmem>>, %arg2: memref<8x128xf32, #tpu.memory_space<vmem>>, %arg3: memref<8x2xf32, #tpu.memory_space<vmem>>) attributes {dimension_semantics = [#tpu.dimension_semantics<parallel>], iteration_bounds = array<i64: 1>, scalar_prefetch = 0 : i64, scratch_operands = 0 : i64, tpu.core_type = #tpu.core_type<tc>, window_params = [{transform_indices = @transform_0, window_bounds = array<i64: 8, 128>}, {transform_indices = @transform_1, window_bounds = array<i64: 8, 128>}, {transform_indices = @transform_2, window_bounds = array<i64: 8, 2>}]} {
    %c0 = arith.constant 0 : index
    %c0_0 = arith.constant 0 : index
    %0 = vector.load %arg1[%c0, %c0_0] : memref<8x128xf32, #tpu.memory_space<vmem>>, vector<8x128xf32>
    %cst = arith.constant dense<0.000000e+00> : vector<8xf32>
    %1 = vector.multi_reduction <add>, %0, %cst [1] : vector<8x128xf32> to vector<8xf32>
    %2 = vector.shape_cast %1 : vector<8xf32> to vector<8x1xf32>
    %cst_1 = arith.constant 7.812500e-03 : f32
    %3 = vector.broadcast %cst_1 : f32 to vector<8x1xf32>
    %4 = arith.mulf %2, %3 : vector<8x1xf32>
    %5 = vector.broadcast %4 : vector<8x1xf32> to vector<8x128xf32>
    %6 = arith.subf %0, %5 : vector<8x128xf32>
    %7 = arith.mulf %6, %6 : vector<8x128xf32>
    %cst_2 = arith.constant dense<0.000000e+00> : vector<8xf32>
    %8 = vector.multi_reduction <add>, %7, %cst_2 [1] : vector<8x128xf32> to vector<8xf32>
    %9 = vector.shape_cast %8 : vector<8xf32> to vector<8x1xf32>
    %cst_3 = arith.constant 0.00787401571 : f32
    %10 = vector.broadcast %cst_3 : f32 to vector<8x1xf32>
    %11 = arith.mulf %9, %10 : vector<8x1xf32>
    %12 = math.sqrt %11 : vector<8x1xf32>
    %cst_4 = arith.constant 9.99999974E-6 : f32
    %13 = vector.broadcast %cst_4 : f32 to vector<8x1xf32>
    %14 = arith.addf %12, %13 : vector<8x1xf32>
    %15 = tpu.reciprocal %14 : vector<8x1xf32> -> vector<8x1xf32>
    %16 = vector.broadcast %15 : vector<8x1xf32> to vector<8x128xf32>
    %17 = arith.mulf %6, %16 : vector<8x128xf32>
    %c0_5 = arith.constant 0 : index
    %c0_6 = arith.constant 0 : index
    %18 = vector.load %arg2[%c0_5, %c0_6] : memref<8x128xf32, #tpu.memory_space<vmem>>, vector<8x128xf32>
    tpu.vector_store %arg2[%c0_5, %c0_6], %17 {strides = array<i32>} : memref<8x128xf32, #tpu.memory_space<vmem>>, vector<8x128xf32>,
    %c0_7 = arith.constant 0 : index
    %c0_8 = arith.constant 0 : index
    %19 = vector.load %arg3[%c0_7, %c0_8] : memref<8x2xf32, #tpu.memory_space<vmem>>, vector<8x1xf32>
    tpu.vector_store %arg3[%c0_7, %c0_8], %4 {strides = array<i32>} : memref<8x2xf32, #tpu.memory_space<vmem>>, vector<8x1xf32>,
    %c0_9 = arith.constant 0 : index
    %c1 = arith.constant 1 : index
    %20 = vector.load %arg3[%c0_9, %c1] : memref<8x2xf32, #tpu.memory_space<vmem>>, vector<8x1xf32>
    tpu.vector_store %arg3[%c0_9, %c1], %14 {strides = array<i32>} : memref<8x2xf32, #tpu.memory_space<vmem>>, vector<8x1xf32>,
    return
  }
  func.func @transform_0(%arg0: i32) -> (i32, i32) {
    %c0_i32 = arith.constant 0 : i32
    %c0_i32_0 = arith.constant 0 : i32
    return %arg0, %c0_i32 : i32, i32
  }
  func.func @transform_1(%arg0: i32) -> (i32, i32) {
    %c0_i32 = arith.constant 0 : i32
    %c0_i32_0 = arith.constant 0 : i32
    return %arg0, %c0_i32 : i32, i32
  }
  func.func @transform_2(%arg0: i32) -> (i32, i32) {
    %c0_i32 = arith.constant 0 : i32
    %c0_i32_0 = arith.constant 0 : i32
    return %arg0, %c0_i32 : i32, i32
  }
}

</mosaic_0001>

<llo_original>
// kernel: tpu_custom_call.1
$region0: #{tpu_custom_call.1}
  #allocation0 [shape = 'u32[]', space=smem, size = 0x4, offset = 0x4, fixed_abs, tag = 'smem constant byte address 0x4 - core index']
  #allocation1 [shape = 'u32[72,128]{1,0:T(1,128)}', space=vmem, size = 0x9000, scoped, tag = 'internal scratch']
  %s0 = inlined_call_operand.hbm [shape: f32[8,128], index: 0, kind: input, shape index: {}]
  %s1 = inlined_call_operand.hbm [shape: f32[8,128], index: 1, kind: output, shape index: {0}]
  %s2 = inlined_call_operand.vmem [shape: f32[8,2], index: 2, kind: output, shape index: {1}]
  %3 = xla_tuple %s1, %s2
  %s4 = sld [smem:[#allocation0]]
  $region26: #{tpu_custom_call.1} parent=0
    _
  %s6 = ssub.s32 1, %s4
  %s7 = scalar_select 0, %s6, %s4
  $region1: #{tpu_custom_call.1} parent=0
    #allocation2 [shape = 'u8[4096]{0}', space=vmem, size = 0x1000, scoped, tag = 'input window, operand 0, single buffered']
    #allocation3 [shape = 's32[1]{0}', space=sflag, size = 0x4, scoped, tag = 'scoped memory for tpu_custom_call.1']
    #allocation4 [shape = 's32[1]{0}', space=sflag, size = 0x4, scoped, tag = 'scoped memory for tpu_custom_call.1']
    #allocation5 [shape = 'u8[4096]{0}', space=vmem, size = 0x1000, scoped, tag = 'output window, operand 0, single buffered']
    %8 = vsyncpa [#allocation3], 0
    %9 = vsyncpa [#allocation4], 0
    // Predicated region
    $region2: #{tpu_custom_call.1} parent=1 // pred_check
      _
    $region3: #{tpu_custom_call.1} parent=1 // pred_check_branch
      %11 = sbr.rel (0) target = $region5
    $region4: #{tpu_custom_call.1} parent=1 // pred_region
      %13 = vsyncadd [#allocation3], 0
      %s15 = sshll.u32 %s0, 4
      %s16 = int_to_ptr.hbm [resolvable:$true] %s15
      %s17 = sshll.u32 [#allocation2], 4
      %s18 = int_to_ptr.vmem [resolvable:$true] %s17
      %20 = dma.hbm_to_vmem [thread:$0]  %s16, 128, %s18, [#allocation3]
    $region5: #{tpu_custom_call.1} parent=1 // pred_fallthru
      _
    // Predicated region
    $region6: #{tpu_custom_call.1} parent=1 // pred_check
      _
    $region7: #{tpu_custom_call.1} parent=1 // pred_check_branch
      %22 = sbr.rel (0) target = $region9
    $region8: #{tpu_custom_call.1} parent=1 // pred_region
      %24 = dma.done [#allocation3], 128
    $region9: #{tpu_custom_call.1} parent=1 // pred_fallthru
      _
    %v25 = vld [vmem:[#allocation2] sm:$0xff]
    %26 = vadd.xlane.f32.xlu0 %v25
    %v27 = vpop.xlane.xlu0 %26
    %v28 = vmul.f32 %v27, 0.0078125
    %v29 = vsub.f32 %v25, %v28
    %v30 = vmul.f32 %v29, %v29
    %31 = vadd.xlane.f32.xlu0 %v30
    %v32 = vpop.xlane.xlu0 %31
    %v33 = vmul.f32 %v32, 0.007874016
    %v34 = vrsqrt.pop %v33
    %v35 = vmul.f32 %v34, %v33
    %v36 = vmul.f32 %v35, %v34
    %v37 = vmul.f32 0.5, %v36
    %v38 = vsub.f32 1.5, %v37
    %v39 = vmul.f32 %v34, %v38
    %v40 = vmul.f32 %v33, %v39
    %vm41 = vcmp.eq.f32.partialorder %v33, inf
    %v42 = vsel %vm41, %v33, %v40
    %vm43 = vcmp.eq.f32.partialorder %v33, 0.0
    %v44 = vand.u32 %v33, 2147483648
    %v45 = vsel %vm43, %v44, %v42
    %v46 = vadd.f32 %v45, 1e-05
    %v47 = vrcp.pop %v46
    %v48 = vmul.f32 %v46, %v47
    %v49 = vsub.f32 1.0, %v48
    %v50 = vmul.f32 %v47, %v49
    %v51 = vadd.f32 %v47, %v50
    %vm52 = vweird.f32 %v46
    %vm53 = vweird.f32 %v47
    %vm54 = vmor %vm52, %vm53
    %v55 = vsel %vm54, %v47, %v51
    %v56 = vand.u32 2147483647, %v46
    %vm57 = vcmp.eq.f32.partialorder %v56, 8.507059e+37
    %v58 = vand.u32 %v46, 2147483648
    %v59 = vor.u32 1.1754944e-38, %v58
    %v60 = vsel %vm57, %v59, %v55
    %v61 = vmul.f32 %v29, %v60
    %62 = vst [vmem:[#allocation5] sm:$0xff] %v61
    %vm63 = vcmask 7168
    %64 = vst.msk [vmem:[%s2] sm:$0xff] %vm63, %v28
    %vm65 = vcmask 15368
    %66 = vst.msk [vmem:[%s2] sm:$0xff] %vm65, %v46
    // Predicated region
    $region10: #{tpu_custom_call.1} parent=1 // pred_check
      _
    $region11: #{tpu_custom_call.1} parent=1 // pred_check_branch
      %68 = sbr.rel (0) target = $region13
    $region12: #{tpu_custom_call.1} parent=1 // pred_region
      %70 = vsyncadd [#allocation4], 0
      %s72 = sshll.u32 [#allocation5], 4
      %s73 = int_to_ptr.vmem [resolvable:$true] %s72
      %s74 = sshll.u32 %s1, 4
      %s75 = int_to_ptr.hbm [resolvable:$true] %s74
      %77 = dma.vmem_to_hbm [thread:$0]  %s73, 128, %s75, [#allocation4]
    $region13: #{tpu_custom_call.1} parent=1 // pred_fallthru
      _
    // Predicated region
    $region14: #{tpu_custom_call.1} parent=1 // pred_check
      _
    $region15: #{tpu_custom_call.1} parent=1 // pred_check_branch
      %79 = sbr.rel (0) target = $region17
    $region16: #{tpu_custom_call.1} parent=1 // pred_region
      _
    $region17: #{tpu_custom_call.1} parent=1 // pred_fallthru
      _
    // Predicated region
    $region18: #{tpu_custom_call.1} parent=1 // pred_check
      _
    $region19: #{tpu_custom_call.1} parent=1 // pred_check_branch
      %81 = sbr.rel (0) target = $region21
    $region20: #{tpu_custom_call.1} parent=1 // pred_region
      %83 = dma.done [#allocation4], 128
    $region21: #{tpu_custom_call.1} parent=1 // pred_fallthru
      _
    // Predicated region
    $region22: #{tpu_custom_call.1} parent=1 // pred_check
      _
    $region23: #{tpu_custom_call.1} parent=1 // pred_check_branch
      %85 = sbr.rel (0) target = $region25
    $region24: #{tpu_custom_call.1} parent=1 // pred_region
      _
    $region25: #{tpu_custom_call.1} parent=1 // pred_fallthru
      _
    %86 = vsyncpa [#allocation3], 1
    %87 = vsyncpa [#allocation4], 1

</llo_original>
